<compile_context>
chip_gen: v7x
topology: tpu7x:2x2x1
jax: 0.10.0
libtpu: 0.0.40
codegen_flags: <defaults>
</compile_context>

<pallas_src>
import functools

import jax
import jax.numpy as jnp
from jax import lax
from jax.experimental import pallas as pl
from jax.experimental.pallas import tpu as pltpu

BN_EPS = 1e-5
VMEM_LIMIT_BYTES = 32 * 1024 * 1024  # explicit: above v5e's 16 MiB default, safe on v7x's 64 MiB


def _round_up(a, b):
    return ((a + b - 1) // b) * b


def _pick_tile_m(m, ckk, f_pad, vmem_budget_bytes=8 << 20):
    """Largest multiple-of-128 M tile whose double-buffered pass-1 working set fits budget."""
    cap = min(2048, _round_up(m, 128))
    tile = 128
    t = 128
    while t <= cap:
        ws = 2 * (t * ckk * 2 + t * f_pad * 4) + 2 * (f_pad * ckk * 2 + 3 * f_pad * 4)
        if ws <= vmem_budget_bytes:
            tile = t
        t += 128
    return tile


def _conv_stats_kernel(pt_ref, w_ref, b_ref, y_ref, sum_ref, sq_ref, *, tile_m, m_valid):
    # pt_ref: [CKK, tile_m] bf16   w_ref: [F, CKK] bf16   b_ref: [F, 1] f32
    # y_ref:  [F, tile_m] f32      sum_ref/sq_ref: [F, 1] f32 accumulators (resident)
    i = pl.program_id(0)

    @pl.when(i == 0)
    def _():
        sum_ref[...] = jnp.zeros_like(sum_ref)
        sq_ref[...] = jnp.zeros_like(sq_ref)

    # MXU: bf16 inputs, f32 accumulation; M on the lane axis -> lane-dense result/store.
    y = jnp.dot(w_ref[...], pt_ref[...], preferred_element_type=jnp.float32)
    y = y + b_ref[...]                      # conv bias, broadcast over lanes
    y_ref[...] = y

    # Mask out the zero-padded columns (m >= M) so BN stats only see real pixels.
    col = i * tile_m + lax.broadcasted_iota(jnp.int32, y.shape, 1)
    valid = col < m_valid
    ym = jnp.where(valid, y, 0.0)
    sum_ref[...] += jnp.sum(ym, axis=1, keepdims=True)
    sq_ref[...] += jnp.sum(ym * ym, axis=1, keepdims=True)


def _bn_relu_kernel(y_ref, sum_ref, sq_ref, g_ref, beta_ref, o_ref, *, m_valid, eps):
    # y_ref/o_ref: [F, tile_m] f32 (aliased); sum/sq/g/beta: [F, 1] f32
    inv_m = jnp.float32(1.0 / m_valid)
    mean = sum_ref[...] * inv_m
    var = jnp.maximum(sq_ref[...] * inv_m - mean * mean, 0.0)   # biased variance
    scale = g_ref[...] * lax.rsqrt(var + jnp.float32(eps))
    shift = beta_ref[...] - mean * scale
    o_ref[...] = jnp.maximum(y_ref[...] * scale + shift, jnp.float32(0.0))   # affine + ReLU


def _im2col_T(x, kernel_size, stride):
    # x: [N, C, H, W] -> P^T: [C*K*K, N*Ho*Wo]  (row order (c, kh, kw) matches weight.reshape)
    N, C, H, W = x.shape
    K, s = kernel_size, stride
    Ho = (H - K) // s + 1
    Wo = (W - K) // s + 1
    cols = []
    for kh in range(K):
        for kw in range(K):
            cols.append(x[:, :, kh:kh + s * Ho:s, kw:kw + s * Wo:s])   # [N, C, Ho, Wo]
    p = jnp.stack(cols, axis=2)                 # [N, C, K*K, Ho, Wo]
    p = jnp.transpose(p, (1, 2, 0, 3, 4))       # [C, K*K, N, Ho, Wo]
    return p.reshape(C * K * K, N * Ho * Wo), Ho, Wo


@functools.partial(jax.jit, static_argnames=("stride", "tile_m"))
def conv_block_forward(x, weight, bias, gamma, beta, *, stride, tile_m=None):
    """x: [N, C, H, W] (NCHW), weight: [F, C, K, K] (OIHW). Returns [N, F, Ho, Wo] f32."""
    N, C, H, W = x.shape
    F, _, K, _ = weight.shape

    pt, Ho, Wo = _im2col_T(x.astype(jnp.float32), K, stride)    # [CKK, M]
    CKK, M = pt.shape

    F_pad = _round_up(F, 8)
    if tile_m is None:
        tile_m = _pick_tile_m(M, CKK, F_pad)
    M_pad = _round_up(M, tile_m)
    num_tiles = M_pad // tile_m

    # bf16 MXU inputs; zero-pad M (lane axis) and F (sublane axis).
    pt_p = jnp.pad(pt, ((0, 0), (0, M_pad - M))).astype(jnp.bfloat16)
    w_mat = jnp.pad(weight.reshape(F, CKK).astype(jnp.float32),
                    ((0, F_pad - F), (0, 0))).astype(jnp.bfloat16)
    b2 = jnp.pad(bias.astype(jnp.float32), (0, F_pad - F)).reshape(F_pad, 1)
    g2 = jnp.pad(gamma.astype(jnp.float32), (0, F_pad - F)).reshape(F_pad, 1)
    be2 = jnp.pad(beta.astype(jnp.float32), (0, F_pad - F)).reshape(F_pad, 1)

    # ---- Pass 1: conv matmul + bias, write Y^T, accumulate per-channel sum / sumsq ----
    y_t, ch_sum, ch_sq = pl.pallas_call(
        functools.partial(_conv_stats_kernel, tile_m=tile_m, m_valid=M),
        out_shape=(
            jax.ShapeDtypeStruct((F_pad, M_pad), jnp.float32),
            jax.ShapeDtypeStruct((F_pad, 1), jnp.float32),
            jax.ShapeDtypeStruct((F_pad, 1), jnp.float32),
        ),
        grid_spec=pltpu.PrefetchScalarGridSpec(
            num_scalar_prefetch=0,
            grid=(num_tiles,),
            in_specs=[
                pl.BlockSpec((CKK, tile_m), lambda i: (0, i)),
                pl.BlockSpec((F_pad, CKK), lambda i: (0, 0)),
                pl.BlockSpec((F_pad, 1), lambda i: (0, 0)),
            ],
            out_specs=[
                pl.BlockSpec((F_pad, tile_m), lambda i: (0, i)),
                pl.BlockSpec((F_pad, 1), lambda i: (0, 0)),
                pl.BlockSpec((F_pad, 1), lambda i: (0, 0)),
            ],
        ),
        compiler_params=pltpu.CompilerParams(
            dimension_semantics=("arbitrary",),          # stats accumulate across tiles
            vmem_limit_bytes=VMEM_LIMIT_BYTES),
        cost_estimate=pl.CostEstimate(
            flops=2 * M_pad * CKK * F_pad,
            transcendentals=0,
            bytes_accessed=CKK * M_pad * 2 + F_pad * CKK * 2
                           + (M_pad * F_pad + 3 * F_pad) * 4),
    )(pt_p, w_mat, b2)

    # ---- Pass 2: normalize + affine + ReLU, in place on Y^T (aliased) ----
    out_t = pl.pallas_call(
        functools.partial(_bn_relu_kernel, m_valid=M, eps=BN_EPS),
        out_shape=jax.ShapeDtypeStruct((F_pad, M_pad), jnp.float32),
        grid_spec=pltpu.PrefetchScalarGridSpec(
            num_scalar_prefetch=0,
            grid=(num_tiles,),
            in_specs=[
                pl.BlockSpec((F_pad, tile_m), lambda i: (0, i)),
                pl.BlockSpec((F_pad, 1), lambda i: (0, 0)),
                pl.BlockSpec((F_pad, 1), lambda i: (0, 0)),
                pl.BlockSpec((F_pad, 1), lambda i: (0, 0)),
                pl.BlockSpec((F_pad, 1), lambda i: (0, 0)),
            ],
            out_specs=pl.BlockSpec((F_pad, tile_m), lambda i: (0, i)),
        ),
        compiler_params=pltpu.CompilerParams(
            dimension_semantics=("parallel",),           # independent tiles -> megacore
            vmem_limit_bytes=VMEM_LIMIT_BYTES),
        input_output_aliases={0: 0},
        cost_estimate=pl.CostEstimate(
            flops=4 * M_pad * F_pad,
            transcendentals=F_pad * num_tiles,
            bytes_accessed=2 * M_pad * F_pad * 4 + 4 * F_pad * 4),
    )(y_t, ch_sum, ch_sq, g2, be2)

    out = out_t[:F, :M].reshape(F, N, Ho, Wo)
    return jnp.transpose(out, (1, 0, 2, 3))              # back to NCHW


def _reference(x, weight, bias, gamma, beta, *, stride):
    y = lax.conv_general_dilated(
        x.astype(jnp.float32), weight.astype(jnp.float32),
        window_strides=(stride, stride), padding="VALID",
        dimension_numbers=("NCHW", "OIHW", "NCHW"))
    y = y + bias.reshape(1, -1, 1, 1)
    mean = jnp.mean(y, axis=(0, 2, 3), keepdims=True)
    var = jnp.mean((y - mean) ** 2, axis=(0, 2, 3), keepdims=True)
    y_hat = (y - mean) * lax.rsqrt(var + BN_EPS)
    z = gamma.reshape(1, -1, 1, 1) * y_hat + beta.reshape(1, -1, 1, 1)
    return jnp.maximum(z, 0.0)


if __name__ == "__main__":
    # Module config: ConvBlock(in_channels=4, out_channels=8, kernel_size=3, stride=1)
    N, C, H, W = 2, 4, 16, 16
    F, K, S = 8, 3, 1

    key = jax.random.PRNGKey(0)
    kx, kw, kb = jax.random.split(key, 3)
    x = jax.random.normal(kx, (N, C, H, W), dtype=jnp.float32)

    # Deterministic parameter init (shapes match nn.Conv2d / nn.BatchNorm2d defaults).
    fan_in = C * K * K
    bound = 1.0 / (fan_in ** 0.5)
    weight = jax.random.uniform(kw, (F, C, K, K), minval=-bound, maxval=bound, dtype=jnp.float32)
    bias = jax.random.uniform(kb, (F,), minval=-bound, maxval=bound, dtype=jnp.float32)
    gamma = jnp.ones((F,), jnp.float32)   # BatchNorm2d weight init
    beta = jnp.zeros((F,), jnp.float32)   # BatchNorm2d bias init

    ref = _reference(x, weight, bias, gamma, beta, stride=S)

    # Multi-tile path (4 tiles of 128) exercises cross-tile BN-stat accumulation.
    out = conv_block_forward(x, weight, bias, gamma, beta, stride=S, tile_m=128)
    jax.block_until_ready(out)
    assert out.shape == (N, F, (H - K) // S + 1, (W - K) // S + 1)
    # bf16 MXU inputs -> slightly looser tolerance vs the pure-f32 reference.
    assert jnp.allclose(out, ref, atol=5e-2, rtol=5e-2), "mismatch vs JAX reference (tiled)"

    # Auto tile size (VMEM-budget derived).
    out2 = conv_block_forward(x, weight, bias, gamma, beta, stride=S)
    jax.block_until_ready(out2)
    assert jnp.allclose(out2, ref, atol=5e-2, rtol=5e-2), "mismatch vs JAX reference (auto tile)"

    print("KERNEL_OK")
</pallas_src>

<mosaic_0001>
module attributes {stable_mosaic.version = 11 : i64} {
  func.func @_conv_stats_kernel(%arg0: i32, %arg1: memref<36x128xbf16, #tpu.memory_space<vmem>>, %arg2: memref<8x36xbf16, #tpu.memory_space<vmem>>, %arg3: memref<8x1xf32, #tpu.memory_space<vmem>>, %arg4: memref<8x128xf32, #tpu.memory_space<vmem>>, %arg5: memref<8x1xf32, #tpu.memory_space<vmem>>, %arg6: memref<8x1xf32, #tpu.memory_space<vmem>>) attributes {dimension_semantics = [#tpu.dimension_semantics<arbitrary>], iteration_bounds = array<i64: 4>, scalar_prefetch = 0 : i64, scratch_operands = 0 : i64, tpu.core_type = #tpu.core_type<tc>, window_params = [{transform_indices = @transform_0, window_bounds = array<i64: 36, 128>}, {pipeline_mode = #tpu.pipeline_mode<synchronous>, transform_indices = @transform_1, window_bounds = array<i64: 8, 36>}, {pipeline_mode = #tpu.pipeline_mode<synchronous>, transform_indices = @transform_2, window_bounds = array<i64: 8, 1>}, {transform_indices = @transform_3, window_bounds = array<i64: 8, 128>}, {pipeline_mode = #tpu.pipeline_mode<synchronous>, transform_indices = @transform_4, window_bounds = array<i64: 8, 1>}, {pipeline_mode = #tpu.pipeline_mode<synchronous>, transform_indices = @transform_5, window_bounds = array<i64: 8, 1>}]} {
    %c0_i32 = arith.constant 0 : i32
    %0 = arith.cmpi eq, %arg0, %c0_i32 : i32
    %1 = arith.extui %0 : i1 to i32
    %c0_i32_0 = arith.constant 0 : i32
    %2 = arith.cmpi ne, %1, %c0_i32_0 : i32
    scf.if %2 {
      %cst_19 = arith.constant 0.000000e+00 : f32
      %29 = vector.broadcast %cst_19 : f32 to vector<8x1xf32>
      %c0_20 = arith.constant 0 : index
      %c0_21 = arith.constant 0 : index
      %30 = vector.load %arg5[%c0_20, %c0_21] : memref<8x1xf32, #tpu.memory_space<vmem>>, vector<8x1xf32>
      tpu.vector_store %arg5[%c0_20, %c0_21], %29 {strides = array<i32>} : memref<8x1xf32, #tpu.memory_space<vmem>>, vector<8x1xf32>,
      %cst_22 = arith.constant 0.000000e+00 : f32
      %31 = vector.broadcast %cst_22 : f32 to vector<8x1xf32>
      %c0_23 = arith.constant 0 : index
      %c0_24 = arith.constant 0 : index
      %32 = vector.load %arg6[%c0_23, %c0_24] : memref<8x1xf32, #tpu.memory_space<vmem>>, vector<8x1xf32>
      tpu.vector_store %arg6[%c0_23, %c0_24], %31 {strides = array<i32>} : memref<8x1xf32, #tpu.memory_space<vmem>>, vector<8x1xf32>,
    } else {
    }
    %c0 = arith.constant 0 : index
    %c0_1 = arith.constant 0 : index
    %3 = vector.load %arg2[%c0, %c0_1] : memref<8x36xbf16, #tpu.memory_space<vmem>>, vector<8x36xbf16>
    %c0_2 = arith.constant 0 : index
    %c0_3 = arith.constant 0 : index
    %4 = vector.load %arg1[%c0_2, %c0_3] : memref<36x128xbf16, #tpu.memory_space<vmem>>, vector<36x128xbf16>
    %cst = arith.constant dense<0.000000e+00> : vector<8x128xf32>
    %5 = tpu.matmul %3, %4, %cst {dimension_numbers = #tpu.dot_dimension_numbers<[1], [0], [0], [1], [0, 0, 1, 1], [], []>} : vector<8x36xbf16>, vector<36x128xbf16>, vector<8x128xf32> -> vector<8x128xf32>
    %c0_4 = arith.constant 0 : index
    %c0_5 = arith.constant 0 : index
    %6 = vector.load %arg3[%c0_4, %c0_5] : memref<8x1xf32, #tpu.memory_space<vmem>>, vector<8x1xf32>
    %7 = vector.broadcast %6 : vector<8x1xf32> to vector<8x128xf32>
    %8 = arith.addf %5, %7 : vector<8x128xf32>
    %c0_6 = arith.constant 0 : index
    %c0_7 = arith.constant 0 : index
    %9 = vector.load %arg4[%c0_6, %c0_7] : memref<8x128xf32, #tpu.memory_space<vmem>>, vector<8x128xf32>
    tpu.vector_store %arg4[%c0_6, %c0_7], %8 {strides = array<i32>} : memref<8x128xf32, #tpu.memory_space<vmem>>, vector<8x128xf32>,
    %c128_i32 = arith.constant 128 : i32
    %10 = arith.muli %arg0, %c128_i32 : i32
    %11 = tpu.iota {dimensions = array<i32: 1>} : vector<8x128xi32>
    %12 = vector.broadcast %10 : i32 to vector<8x128xi32>
    %13 = arith.addi %12, %11 : vector<8x128xi32>
    %c392_i32 = arith.constant 392 : i32
    %14 = vector.broadcast %c392_i32 : i32 to vector<8x128xi32>
    %15 = arith.cmpi slt, %13, %14 : vector<8x128xi32>
    %cst_8 = arith.constant 0.000000e+00 : f32
    %16 = vector.broadcast %cst_8 : f32 to vector<8x128xf32>
    %17 = arith.select %15, %8, %16 : vector<8x128xi1>, vector<8x128xf32>
    %c0_9 = arith.constant 0 : index
    %c0_10 = arith.constant 0 : index
    %18 = vector.load %arg5[%c0_9, %c0_10] : memref<8x1xf32, #tpu.memory_space<vmem>>, vector<8x1xf32>
    %cst_11 = arith.constant dense<0.000000e+00> : vector<8xf32>
    %19 = vector.multi_reduction <add>, %17, %cst_11 [1] : vector<8x128xf32> to vector<8xf32>
    %20 = vector.shape_cast %19 : vector<8xf32> to vector<8x1xf32>
    %21 = arith.addf %18, %20 : vector<8x1xf32>
    %c0_12 = arith.constant 0 : index
    %c0_13 = arith.constant 0 : index
    %22 = vector.load %arg5[%c0_12, %c0_13] : memref<8x1xf32, #tpu.memory_space<vmem>>, vector<8x1xf32>
    tpu.vector_store %arg5[%c0_12, %c0_13], %21 {strides = array<i32>} : memref<8x1xf32, #tpu.memory_space<vmem>>, vector<8x1xf32>,
    %c0_14 = arith.constant 0 : index
    %c0_15 = arith.constant 0 : index
    %23 = vector.load %arg6[%c0_14, %c0_15] : memref<8x1xf32, #tpu.memory_space<vmem>>, vector<8x1xf32>
    %24 = arith.mulf %17, %17 : vector<8x128xf32>
    %cst_16 = arith.constant dense<0.000000e+00> : vector<8xf32>
    %25 = vector.multi_reduction <add>, %24, %cst_16 [1] : vector<8x128xf32> to vector<8xf32>
    %26 = vector.shape_cast %25 : vector<8xf32> to vector<8x1xf32>
    %27 = arith.addf %23, %26 : vector<8x1xf32>
    %c0_17 = arith.constant 0 : index
    %c0_18 = arith.constant 0 : index
    %28 = vector.load %arg6[%c0_17, %c0_18] : memref<8x1xf32, #tpu.memory_space<vmem>>, vector<8x1xf32>
    tpu.vector_store %arg6[%c0_17, %c0_18], %27 {strides = array<i32>} : memref<8x1xf32, #tpu.memory_space<vmem>>, vector<8x1xf32>,
    return
  }
  func.func @transform_0(%arg0: i32) -> (i32, i32) {
    %c0_i32 = arith.constant 0 : i32
    %c0_i32_0 = arith.constant 0 : i32
    return %c0_i32, %arg0 : i32, i32
  }
  func.func @transform_1(%arg0: i32) -> (i32, i32) {
    %c0_i32 = arith.constant 0 : i32
    %c0_i32_0 = arith.constant 0 : i32
    %c0_i32_1 = arith.constant 0 : i32
    return %c0_i32, %c0_i32_0 : i32, i32
  }
  func.func @transform_2(%arg0: i32) -> (i32, i32) {
    %c0_i32 = arith.constant 0 : i32
    %c0_i32_0 = arith.constant 0 : i32
    %c0_i32_1 = arith.constant 0 : i32
    return %c0_i32, %c0_i32_0 : i32, i32
  }
  func.func @transform_3(%arg0: i32) -> (i32, i32) {
    %c0_i32 = arith.constant 0 : i32
    %c0_i32_0 = arith.constant 0 : i32
    return %c0_i32, %arg0 : i32, i32
  }
  func.func @transform_4(%arg0: i32) -> (i32, i32) {
    %c0_i32 = arith.constant 0 : i32
    %c0_i32_0 = arith.constant 0 : i32
    %c0_i32_1 = arith.constant 0 : i32
    return %c0_i32, %c0_i32_0 : i32, i32
  }
  func.func @transform_5(%arg0: i32) -> (i32, i32) {
    %c0_i32 = arith.constant 0 : i32
    %c0_i32_0 = arith.constant 0 : i32
    %c0_i32_1 = arith.constant 0 : i32
    return %c0_i32, %c0_i32_0 : i32, i32
  }
}

module attributes {stable_mosaic.version = 11 : i64} {
  func.func @_bn_relu_kernel(%arg0: i32, %arg1: memref<8x128xf32, #tpu.memory_space<vmem>>, %arg2: memref<8x1xf32, #tpu.memory_space<vmem>>, %arg3: memref<8x1xf32, #tpu.memory_space<vmem>>, %arg4: memref<8x1xf32, #tpu.memory_space<vmem>>, %arg5: memref<8x1xf32, #tpu.memory_space<vmem>>, %arg6: memref<8x128xf32, #tpu.memory_space<vmem>>) attributes {dimension_semantics = [#tpu.dimension_semantics<parallel>], iteration_bounds = array<i64: 4>, scalar_prefetch = 0 : i64, scratch_operands = 0 : i64, tpu.core_type = #tpu.core_type<tc>, window_params = [{transform_indices = @transform_0, window_bounds = array<i64: 8, 128>}, {pipeline_mode = #tpu.pipeline_mode<synchronous>, transform_indices = @transform_1, window_bounds = array<i64: 8, 1>}, {pipeline_mode = #tpu.pipeline_mode<synchronous>, transform_indices = @transform_2, window_bounds = array<i64: 8, 1>}, {pipeline_mode = #tpu.pipeline_mode<synchronous>, transform_indices = @transform_3, window_bounds = array<i64: 8, 1>}, {pipeline_mode = #tpu.pipeline_mode<synchronous>, transform_indices = @transform_4, window_bounds = array<i64: 8, 1>}, {transform_indices = @transform_5, window_bounds = array<i64: 8, 128>}]} {
    %c0 = arith.constant 0 : index
    %c0_0 = arith.constant 0 : index
    %0 = vector.load %arg2[%c0, %c0_0] : memref<8x1xf32, #tpu.memory_space<vmem>>, vector<8x1xf32>
    %cst = arith.constant 0.00255102036 : f32
    %1 = vector.broadcast %cst : f32 to vector<8x1xf32>
    %2 = arith.mulf %0, %1 : vector<8x1xf32>
    %c0_1 = arith.constant 0 : index
    %c0_2 = arith.constant 0 : index
    %3 = vector.load %arg3[%c0_1, %c0_2] : memref<8x1xf32, #tpu.memory_space<vmem>>, vector<8x1xf32>
    %cst_3 = arith.constant 0.00255102036 : f32
    %4 = vector.broadcast %cst_3 : f32 to vector<8x1xf32>
    %5 = arith.mulf %3, %4 : vector<8x1xf32>
    %6 = arith.mulf %2, %2 : vector<8x1xf32>
    %7 = arith.subf %5, %6 : vector<8x1xf32>
    %cst_4 = arith.constant 0.000000e+00 : f32
    %8 = vector.broadcast %cst_4 : f32 to vector<8x1xf32>
    %9 = arith.maximumf %7, %8 : vector<8x1xf32>
    %c0_5 = arith.constant 0 : index
    %c0_6 = arith.constant 0 : index
    %10 = vector.load %arg4[%c0_5, %c0_6] : memref<8x1xf32, #tpu.memory_space<vmem>>, vector<8x1xf32>
    %cst_7 = arith.constant 9.99999974E-6 : f32
    %11 = vector.broadcast %cst_7 : f32 to vector<8x1xf32>
    %12 = arith.addf %9, %11 : vector<8x1xf32>
    %13 = math.rsqrt %12 : vector<8x1xf32>
    %14 = arith.mulf %10, %13 : vector<8x1xf32>
    %c0_8 = arith.constant 0 : index
    %c0_9 = arith.constant 0 : index
    %15 = vector.load %arg5[%c0_8, %c0_9] : memref<8x1xf32, #tpu.memory_space<vmem>>, vector<8x1xf32>
    %16 = arith.mulf %2, %14 : vector<8x1xf32>
    %17 = arith.subf %15, %16 : vector<8x1xf32>
    %c0_10 = arith.constant 0 : index
    %c0_11 = arith.constant 0 : index
    %18 = vector.load %arg1[%c0_10, %c0_11] : memref<8x128xf32, #tpu.memory_space<vmem>>, vector<8x128xf32>
    %19 = vector.broadcast %14 : vector<8x1xf32> to vector<8x128xf32>
    %20 = arith.mulf %18, %19 : vector<8x128xf32>
    %21 = vector.broadcast %17 : vector<8x1xf32> to vector<8x128xf32>
    %22 = arith.addf %20, %21 : vector<8x128xf32>
    %cst_12 = arith.constant 0.000000e+00 : f32
    %23 = vector.broadcast %cst_12 : f32 to vector<8x128xf32>
    %24 = arith.maximumf %22, %23 : vector<8x128xf32>
    %c0_13 = arith.constant 0 : index
    %c0_14 = arith.constant 0 : index
    %25 = vector.load %arg6[%c0_13, %c0_14] : memref<8x128xf32, #tpu.memory_space<vmem>>, vector<8x128xf32>
    tpu.vector_store %arg6[%c0_13, %c0_14], %24 {strides = array<i32>} : memref<8x128xf32, #tpu.memory_space<vmem>>, vector<8x128xf32>,
    return
  }
  func.func @transform_0(%arg0: i32) -> (i32, i32) {
    %c0_i32 = arith.constant 0 : i32
    %c0_i32_0 = arith.constant 0 : i32
    return %c0_i32, %arg0 : i32, i32
  }
  func.func @transform_1(%arg0: i32) -> (i32, i32) {
    %c0_i32 = arith.constant 0 : i32
    %c0_i32_0 = arith.constant 0 : i32
    %c0_i32_1 = arith.constant 0 : i32
    return %c0_i32, %c0_i32_0 : i32, i32
  }
  func.func @transform_2(%arg0: i32) -> (i32, i32) {
    %c0_i32 = arith.constant 0 : i32
    %c0_i32_0 = arith.constant 0 : i32
    %c0_i32_1 = arith.constant 0 : i32
    return %c0_i32, %c0_i32_0 : i32, i32
  }
  func.func @transform_3(%arg0: i32) -> (i32, i32) {
    %c0_i32 = arith.constant 0 : i32
    %c0_i32_0 = arith.constant 0 : i32
    %c0_i32_1 = arith.constant 0 : i32
    return %c0_i32, %c0_i32_0 : i32, i32
  }
  func.func @transform_4(%arg0: i32) -> (i32, i32) {
    %c0_i32 = arith.constant 0 : i32
    %c0_i32_0 = arith.constant 0 : i32
    %c0_i32_1 = arith.constant 0 : i32
    return %c0_i32, %c0_i32_0 : i32, i32
  }
  func.func @transform_5(%arg0: i32) -> (i32, i32) {
    %c0_i32 = arith.constant 0 : i32
    %c0_i32_0 = arith.constant 0 : i32
    return %c0_i32, %arg0 : i32, i32
  }
}

</mosaic_0001>

<llo_original>
// kernel: conv_block_forward.3
$region0: #{conv_block_forward.3}
  #allocation0 [shape = 'u32[]', space=smem, size = 0x4, offset = 0x4, fixed_abs, tag = 'smem constant byte address 0x4 - core index']
  #allocation1 [shape = 'u32[144,128]{1,0:T(1,128)}', space=vmem, size = 0x12000, scoped, tag = 'internal scratch']
  %s0 = inlined_call_operand.vmem [shape: f32[8,512], index: 0, kind: input, shape index: {}, may-alias: {0,5}]
  %s1 = inlined_call_operand.vmem [shape: f32[8,1], index: 1, kind: input, shape index: {}]
  %s2 = inlined_call_operand.vmem [shape: f32[8,1], index: 2, kind: input, shape index: {}]
  %s3 = inlined_call_operand.vmem [shape: f32[8,1], index: 3, kind: input, shape index: {}]
  %s4 = inlined_call_operand.vmem [shape: f32[8,1], index: 4, kind: input, shape index: {}]
  %s5 = inlined_call_operand.vmem [shape: f32[8,512], index: 5, kind: output, shape index: {}, may-alias: {0,5}]
  %s6 = sld [smem:[#allocation0]]
  $region53: #{conv_block_forward.3} parent=0
    _
  %s8 = ssub.s32 1, %s6
  %s9 = scalar_select 0, %s8, %s6
  loop: start=0, step=1, limit=6
  $region2: #{conv_block_forward.3} parent=0 // loop_pre_header
    _
  $region3: #{conv_block_forward.3} parent=0 // loop_header
    %s11 = sphi 0, %s15
    %p12 = scmp.ge.s32.totalorder %s11, 6
    %s21 = sphi 0, %s23
    %s24 = sphi 0, %s21
    %s25 = sphi 0, %s24
    %s41 = sphi 0, %s25
    %s45 = sphi 0, %s45
    %s47 = sphi 0, %s45
    %s48 = sphi 0, %s47
    %s62 = sphi 0, %s48
    %s66 = sphi 0, %s66
    %s68 = sphi 0, %s66
    %s69 = sphi 0, %s68
    %s83 = sphi 0, %s69
    %s87 = sphi 0, %s87
    %s89 = sphi 0, %s87
    %s90 = sphi 0, %s89
    %s104 = sphi 0, %s90
    %s108 = sphi 0, %s108
    %s110 = sphi 0, %s108
    %s111 = sphi 0, %s110
    %s125 = sphi 0, %s111
    %s131 = sphi 0, %s133
    %s134 = sphi 0, %s131
    %s135 = sphi 0, %s134
    %s151 = sphi 0, %s135
  $region4: #{conv_block_forward.3} parent=0 // loop_header_branch
    %14 = sbr.rel (%p12) target = $region8
  $region5: #{conv_block_forward.3} parent=0 // loop_body
    %s16 = ssub.s32 %s11, 1
    %s17 = ssub.s32 %s11, 2
    %s18 = sadd.s32 %s11, 1
    %s19 = ssub.s32 %s11, %s18
    %p20 = scmp.eq.s32.totalorder %s19, 0
    %s22 = sadd.s32 %s21, 1
    %s23 = scalar_select %p20, %s21, %s22
    %p26 = pneg %p20
    %p27 = scmp.eq.s32.totalorder %s11, 3
    %p28 = por %p26, %p27
    %p29 = scmp.ne.s32.totalorder %s21, %s24
    %p30 = scmp.eq.s32.totalorder %s11, 0
    %p31 = por %p29, %p30
    %p32 = scmp.ne.s32.totalorder %s21, %s24
    %p33 = scmp.eq.s32.totalorder %s16, 3
    %p34 = por %p32, %p33
    %p35 = scmp.ne.s32.totalorder %s24, %s25
    %p36 = scmp.eq.s32.totalorder %s16, 0
    %p37 = por %p35, %p36
    %p38 = scmp.ne.s32.totalorder %s24, %s25
    %p39 = scmp.eq.s32.totalorder %s17, 3
    %p40 = por %p38, %p39
    %p42 = scmp.ne.s32.totalorder %s25, %s41
    %p43 = scmp.eq.s32.totalorder %s17, 0
    %p44 = por %p42, %p43
    %s46 = sadd.s32 %s45, 1
    %p49 = scmp.eq.s32.totalorder %s11, 3
    %p50 = scmp.ne.s32.totalorder %s45, %s47
    %p51 = scmp.eq.s32.totalorder %s11, 0
    %p52 = por %p50, %p51
    %p53 = scmp.ne.s32.totalorder %s45, %s47
    %p54 = scmp.eq.s32.totalorder %s16, 3
    %p55 = por %p53, %p54
    %p56 = scmp.ne.s32.totalorder %s47, %s48
    %p57 = scmp.eq.s32.totalorder %s16, 0
    %p58 = por %p56, %p57
    %p59 = scmp.ne.s32.totalorder %s47, %s48
    %p60 = scmp.eq.s32.totalorder %s17, 3
    %p61 = por %p59, %p60
    %p63 = scmp.ne.s32.totalorder %s48, %s62
    %p64 = scmp.eq.s32.totalorder %s17, 0
    %p65 = por %p63, %p64
    %s67 = sadd.s32 %s66, 1
    %p70 = scmp.eq.s32.totalorder %s11, 3
    %p71 = scmp.ne.s32.totalorder %s66, %s68
    %p72 = scmp.eq.s32.totalorder %s11, 0
    %p73 = por %p71, %p72
    %p74 = scmp.ne.s32.totalorder %s66, %s68
    %p75 = scmp.eq.s32.totalorder %s16, 3
    %p76 = por %p74, %p75
    %p77 = scmp.ne.s32.totalorder %s68, %s69
    %p78 = scmp.eq.s32.totalorder %s16, 0
    %p79 = por %p77, %p78
    %p80 = scmp.ne.s32.totalorder %s68, %s69
    %p81 = scmp.eq.s32.totalorder %s17, 3
    %p82 = por %p80, %p81
    %p84 = scmp.ne.s32.totalorder %s69, %s83
    %p85 = scmp.eq.s32.totalorder %s17, 0
    %p86 = por %p84, %p85
    %s88 = sadd.s32 %s87, 1
    %p91 = scmp.eq.s32.totalorder %s11, 3
    %p92 = scmp.ne.s32.totalorder %s87, %s89
    %p93 = scmp.eq.s32.totalorder %s11, 0
    %p94 = por %p92, %p93
    %p95 = scmp.ne.s32.totalorder %s87, %s89
    %p96 = scmp.eq.s32.totalorder %s16, 3
    %p97 = por %p95, %p96
    %p98 = scmp.ne.s32.totalorder %s89, %s90
    %p99 = scmp.eq.s32.totalorder %s16, 0
    %p100 = por %p98, %p99
    %p101 = scmp.ne.s32.totalorder %s89, %s90
    %p102 = scmp.eq.s32.totalorder %s17, 3
    %p103 = por %p101, %p102
    %p105 = scmp.ne.s32.totalorder %s90, %s104
    %p106 = scmp.eq.s32.totalorder %s17, 0
    %p107 = por %p105, %p106
    %s109 = sadd.s32 %s108, 1
    %p112 = scmp.eq.s32.totalorder %s11, 3
    %p113 = scmp.ne.s32.totalorder %s108, %s110
    %p114 = scmp.eq.s32.totalorder %s11, 0
    %p115 = por %p113, %p114
    %p116 = scmp.ne.s32.totalorder %s108, %s110
    %p117 = scmp.eq.s32.totalorder %s16, 3
    %p118 = por %p116, %p117
    %p119 = scmp.ne.s32.totalorder %s110, %s111
    %p120 = scmp.eq.s32.totalorder %s16, 0
    %p121 = por %p119, %p120
    %p122 = scmp.ne.s32.totalorder %s110, %s111
    %p123 = scmp.eq.s32.totalorder %s17, 3
    %p124 = por %p122, %p123
    %p126 = scmp.ne.s32.totalorder %s111, %s125
    %p127 = scmp.eq.s32.totalorder %s17, 0
    %p128 = por %p126, %p127
    %s129 = ssub.s32 %s11, %s18
    %p130 = scmp.eq.s32.totalorder %s129, 0
    %s132 = sadd.s32 %s131, 1
    %s133 = scalar_select %p130, %s131, %s132
    %p136 = pneg %p130
    %p137 = scmp.eq.s32.totalorder %s11, 3
    %p138 = por %p136, %p137
    %p139 = scmp.ne.s32.totalorder %s131, %s134
    %p140 = scmp.eq.s32.totalorder %s11, 0
    %p141 = por %p139, %p140
    %p142 = scmp.ne.s32.totalorder %s131, %s134
    %p143 = scmp.eq.s32.totalorder %s16, 3
    %p144 = por %p142, %p143
    %p145 = scmp.ne.s32.totalorder %s134, %s135
    %p146 = scmp.eq.s32.totalorder %s16, 0
    %p147 = por %p145, %p146
    %p148 = scmp.ne.s32.totalorder %s134, %s135
    %p149 = scmp.eq.s32.totalorder %s17, 3
    %p150 = por %p148, %p149
    %p152 = scmp.ne.s32.totalorder %s135, %s151
    %p153 = scmp.eq.s32.totalorder %s17, 0
    %p154 = por %p152, %p153
    %p155 = scmp.le.s32.totalorder 1, %s11
    %p156 = scmp.lt.s32.totalorder %s11, 5
    %p157 = pnand %p155, %p156
    %p158 = pneg %p157
    // Predicated region
    $region9: #{conv_block_forward.3} parent=5 // pred_check
      _
    $region10: #{conv_block_forward.3} parent=5 // pred_check_branch
      %160 = sbr.rel (%p157) target = $region12
    $region11: #{conv_block_forward.3} parent=5 // pred_region
      %s161 = ssub.s32 %s11, 1
      // Predicated region
      $region13: #{conv_block_forward.3} parent=11 // pred_check
        %p162 = pneg %p58
      $region14: #{conv_block_forward.3} parent=11 // pred_check_branch
        %164 = sbr.rel (%p162) target = $region16
      $region15: #{conv_block_forward.3} parent=11 // pred_region
        _
      $region16: #{conv_block_forward.3} parent=11 // pred_fallthru
        _
      // Predicated region
      $region17: #{conv_block_forward.3} parent=11 // pred_check
        %p165 = pneg %p79
      $region18: #{conv_block_forward.3} parent=11 // pred_check_branch
        %167 = sbr.rel (%p165) target = $region20
      $region19: #{conv_block_forward.3} parent=11 // pred_region
        _
      $region20: #{conv_block_forward.3} parent=11 // pred_fallthru
        _
      // Predicated region
      $region21: #{conv_block_forward.3} parent=11 // pred_check
        %p168 = pneg %p100
      $region22: #{conv_block_forward.3} parent=11 // pred_check_branch
        %170 = sbr.rel (%p168) target = $region24
      $region23: #{conv_block_forward.3} parent=11 // pred_region
        _
      $region24: #{conv_block_forward.3} parent=11 // pred_fallthru
        _
      // Predicated region
      $region25: #{conv_block_forward.3} parent=11 // pred_check
        %p171 = pneg %p121
      $region26: #{conv_block_forward.3} parent=11 // pred_check_branch
        %173 = sbr.rel (%p171) target = $region28
      $region27: #{conv_block_forward.3} parent=11 // pred_region
        _
      $region28: #{conv_block_forward.3} parent=11 // pred_fallthru
        _
    $region12: #{conv_block_forward.3} parent=5 // pred_fallthru
      _
    %p174 = scmp.lt.s32.totalorder %s11, 4
    // Predicated region
    $region29: #{conv_block_forward.3} parent=5 // pred_check
      %p175 = pneg %p174
    $region30: #{conv_block_forward.3} parent=5 // pred_check_branch
      %177 = sbr.rel (%p175) target = $region32
    $region31: #{conv_block_forward.3} parent=5 // pred_region
      // Predicated region
      $region33: #{conv_block_forward.3} parent=31 // pred_check
        %p178 = pneg %p31
      $region34: #{conv_block_forward.3} parent=31 // pred_check_branch
        %180 = sbr.rel (%p178) target = $region36
      $region35: #{conv_block_forward.3} parent=31 // pred_region
        %p181 = scmp.lt.s32.totalorder %s11, 3
        %s182 = scalar_select %p181, %s11, 3
        %s183 = smul.addr %s182, 8
        %s184 = scalar_lea.vmem %s0, %s183
      $region36: #{conv_block_forward.3} parent=31 // pred_fallthru
        _
    $region32: #{conv_block_forward.3} parent=5 // pred_fallthru
      _
    %p185 = scmp.le.s32.totalorder 1, %s11
    %p186 = scmp.lt.s32.totalorder %s11, 5
    %p187 = pnand %p185, %p186
    %p188 = pneg %p187
    // Predicated region
    $region37: #{conv_block_forward.3} parent=5 // pred_check
      _
    $region38: #{conv_block_forward.3} parent=5 // pred_check_branch
      %190 = sbr.rel (%p187) target = $region40
    $region39: #{conv_block_forward.3} parent=5 // pred_region
      %s191 = ssub.s32 %s11, 1
      %p192 = scmp.lt.s32.totalorder %s16, 3
      %s193 = scalar_select %p192, %s16, 3
      %s194 = smul.addr %s193, 8
      %s195 = scalar_lea.vmem %s0, %s194
      %p196 = pneg %p37
      %p197 = pneg %p34
      %p198 = pneg %p58
      %p199 = pneg %p55
      %p200 = pneg %p79
      %p201 = pneg %p76
      %p202 = pneg %p100
      %p203 = pneg %p97
      %p204 = pneg %p121
      %p205 = pneg %p118
      %p206 = pneg %p147
      %p207 = pneg %p144
      %p208 = scmp.lt.s32.totalorder %s16, 3
      %s209 = scalar_select %p208, %s16, 3
      %s210 = smul.addr %s209, 8
      %s211 = scalar_lea.vmem %s5, %s210
      %p212 = scmp.lt.s32.totalorder %s16, 3
      %s213 = scalar_select %p212, %s16, 3
      %s214 = smul.addr %s213, 8
      %s215 = scalar_lea.vmem %s0, %s214
      %p216 = scmp.lt.s32.totalorder %s16, 3
      %s217 = scalar_select %p216, %s16, 3
      %s218 = smul.addr %s217, 8
      %s219 = scalar_lea.vmem %s5, %s218
      %v220 = vld [vmem:[%s1] sm:$0xff]
      %v221 = vmul.f32 %v220, 0.0025510204
      %v222 = vld [vmem:[%s2] sm:$0xff]
      %v223 = vmul.f32 %v222, 0.0025510204
      %v224 = vmul.f32 %v221, %v221
      %v225 = vsub.f32 %v223, %v224
      %v226 = vmax.f32 %v225, 0.0
      %v227 = vld [vmem:[%s3] sm:$0xff]
      %v228 = vadd.f32 %v226, 1e-05
      %v229 = vrsqrt.pop %v228
      %v230 = vmul.f32 %v227, %v229
      %v231 = vld [vmem:[%s4] sm:$0xff]
      %v232 = vmul.f32 %v221, %v230
      %v233 = vsub.f32 %v231, %v232
      %v234 = vld [vmem:[%s215] sm:$0xff]
      %236 = vset.pattern.permute.xlu0 0
      %237 = vperm.xlu0 %236, %v230
      %v238 = vpop.permute.xlu0 %237
      %v240 = vmul.f32 %v234, %v238
      %242 = vset.pattern.permute.xlu0 0
      %243 = vperm.xlu0 %242, %v233
      %v244 = vpop.permute.xlu0 %243
      %v246 = vadd.f32 %v240, %v244
      %v247 = vmax.f32 %v246, 0.0
      %248 = vst [vmem:[%s219] sm:$0xff] %v247
      %p249 = scmp.lt.s32.totalorder %s16, 3
      %s250 = scalar_select %p249, %s16, 3
      %s251 = smul.addr %s250, 8
      %s252 = scalar_lea.vmem %s5, %s251
      // Predicated region
      $region41: #{conv_block_forward.3} parent=39 // pred_check
        %p253 = pneg %p144
      $region42: #{conv_block_forward.3} parent=39 // pred_check_branch
        %255 = sbr.rel (%p253) target = $region44
      $region43: #{conv_block_forward.3} parent=39 // pred_region
        _
      $region44: #{conv_block_forward.3} parent=39 // pred_fallthru
        _
    $region40: #{conv_block_forward.3} parent=5 // pred_fallthru
      _
    %p256 = scmp.le.s32.totalorder 2, %s11
    // Predicated region
    $region45: #{conv_block_forward.3} parent=5 // pred_check
      %p257 = pneg %p256
    $region46: #{conv_block_forward.3} parent=5 // pred_check_branch
      %259 = sbr.rel (%p257) target = $region48
    $region47: #{conv_block_forward.3} parent=5 // pred_region
      %s260 = ssub.s32 %s11, 2
      // Predicated region
      $region49: #{conv_block_forward.3} parent=47 // pred_check
        %p261 = pneg %p150
      $region50: #{conv_block_forward.3} parent=47 // pred_check_branch
        %263 = sbr.rel (%p261) target = $region52
      $region51: #{conv_block_forward.3} parent=47 // pred_region
        %p264 = scmp.lt.s32.totalorder %s17, 3
        %s265 = scalar_select %p264, %s17, 3
        %s266 = smul.addr %s265, 8
        %s267 = scalar_lea.vmem %s5, %s266
      $region52: #{conv_block_forward.3} parent=47 // pred_fallthru
        _
    $region48: #{conv_block_forward.3} parent=5 // pred_fallthru
      _
  $region6: #{conv_block_forward.3} parent=0 // loop_footer
    %s15 = sadd.s32 1, %s11
  $region7: #{conv_block_forward.3} parent=0 // loop_footer_branch
    %10 = sbr.rel target = $region3
  $region8: #{conv_block_forward.3} parent=0 // loop_exit
    _

// kernel: conv_block_forward.2
$region0: #{conv_block_forward.2}
  #allocation0 [shape = 'u32[]', space=smem, size = 0x4, offset = 0x4, fixed_abs, tag = 'smem constant byte address 0x4 - core index']
  #allocation1 [shape = 'u32[144,128]{1,0:T(1,128)}', space=vmem, size = 0x12000, scoped, tag = 'internal scratch']
  %s0 = inlined_call_operand.vmem [shape: bf16[36,512], index: 0, kind: input, shape index: {}]
  %s1 = inlined_call_operand.vmem [shape: bf16[8,36], index: 1, kind: input, shape index: {}]
  %s2 = inlined_call_operand.vmem [shape: f32[8,1], index: 2, kind: input, shape index: {}]
  %s3 = inlined_call_operand.vmem [shape: f32[8,512], index: 3, kind: output, shape index: {0}]
  %s4 = inlined_call_operand.vmem [shape: f32[8,1], index: 4, kind: output, shape index: {1}]
  %s5 = inlined_call_operand.vmem [shape: f32[8,1], index: 5, kind: output, shape index: {2}]
  %6 = xla_tuple %s3, %s4, %s5
  %s7 = sld [smem:[#allocation0]]
  $region106: #{conv_block_forward.2} parent=0
    _
  %s9 = ssub.s32 1, %s7
  %s10 = scalar_select 0, %s9, %s7
  $region1: #{conv_block_forward.2} parent=0
    #allocation2 [shape = 'u8[20480]{0}', space=vmem, size = 0x5000, scoped, tag = 'input window, operand 0']
    loop: start=0, step=1, limit=6
    $region2: #{conv_block_forward.2} parent=1 // loop_pre_header
      _
    $region3: #{conv_block_forward.2} parent=1 // loop_header
      %s12 = sphi 0, %s16
      %p13 = scmp.ge.s32.totalorder %s12, 6
      %s22 = sphi 0, %s24
      %s25 = sphi 0, %s22
      %s26 = sphi 0, %s25
      %s42 = sphi 0, %s26
      %s46 = sphi 0, %s46
      %s48 = sphi 0, %s46
      %s49 = sphi 0, %s48
      %s63 = sphi 0, %s49
      %s67 = sphi 0, %s67
      %s69 = sphi 0, %s67
      %s70 = sphi 0, %s69
      %s84 = sphi 0, %s70
      %s90 = sphi 0, %s92
      %s93 = sphi 0, %s90
      %s94 = sphi 0, %s93
      %s110 = sphi 0, %s94
      %s114 = sphi 0, %s114
      %s116 = sphi 0, %s114
      %s117 = sphi 0, %s116
      %s131 = sphi 0, %s117
      %s135 = sphi 0, %s135
      %s137 = sphi 0, %s135
      %s138 = sphi 0, %s137
      %s152 = sphi 0, %s138
    $region4: #{conv_block_forward.2} parent=1 // loop_header_branch
      %15 = sbr.rel (%p13) target = $region8
    $region5: #{conv_block_forward.2} parent=1 // loop_body
      %s17 = ssub.s32 %s12, 1
      %s18 = ssub.s32 %s12, 2
      %s19 = sadd.s32 %s12, 1
      %s20 = ssub.s32 %s12, %s19
      %p21 = scmp.eq.s32.totalorder %s20, 0
      %s23 = sadd.s32 %s22, 1
      %s24 = scalar_select %p21, %s22, %s23
      %p27 = pneg %p21
      %p28 = scmp.eq.s32.totalorder %s12, 3
      %p29 = por %p27, %p28
      %p30 = scmp.ne.s32.totalorder %s22, %s25
      %p31 = scmp.eq.s32.totalorder %s12, 0
      %p32 = por %p30, %p31
      %p33 = scmp.ne.s32.totalorder %s22, %s25
      %p34 = scmp.eq.s32.totalorder %s17, 3
      %p35 = por %p33, %p34
      %p36 = scmp.ne.s32.totalorder %s25, %s26
      %p37 = scmp.eq.s32.totalorder %s17, 0
      %p38 = por %p36, %p37
      %p39 = scmp.ne.s32.totalorder %s25, %s26
      %p40 = scmp.eq.s32.totalorder %s18, 3
      %p41 = por %p39, %p40
      %p43 = scmp.ne.s32.totalorder %s26, %s42
      %p44 = scmp.eq.s32.totalorder %s18, 0
      %p45 = por %p43, %p44
      %s47 = sadd.s32 %s46, 1
      %p50 = scmp.eq.s32.totalorder %s12, 3
      %p51 = scmp.ne.s32.totalorder %s46, %s48
      %p52 = scmp.eq.s32.totalorder %s12, 0
      %p53 = por %p51, %p52
      %p54 = scmp.ne.s32.totalorder %s46, %s48
      %p55 = scmp.eq.s32.totalorder %s17, 3
      %p56 = por %p54, %p55
      %p57 = scmp.ne.s32.totalorder %s48, %s49
      %p58 = scmp.eq.s32.totalorder %s17, 0
      %p59 = por %p57, %p58
      %p60 = scmp.ne.s32.totalorder %s48, %s49
      %p61 = scmp.eq.s32.totalorder %s18, 3
      %p62 = por %p60, %p61
      %p64 = scmp.ne.s32.totalorder %s49, %s63
      %p65 = scmp.eq.s32.totalorder %s18, 0
      %p66 = por %p64, %p65
      %s68 = sadd.s32 %s67, 1
      %p71 = scmp.eq.s32.totalorder %s12, 3
      %p72 = scmp.ne.s32.totalorder %s67, %s69
      %p73 = scmp.eq.s32.totalorder %s12, 0
      %p74 = por %p72, %p73
      %p75 = scmp.ne.s32.totalorder %s67, %s69
      %p76 = scmp.eq.s32.totalorder %s17, 3
      %p77 = por %p75, %p76
      %p78 = scmp.ne.s32.totalorder %s69, %s70
      %p79 = scmp.eq.s32.totalorder %s17, 0
      %p80 = por %p78, %p79
      %p81 = scmp.ne.s32.totalorder %s69, %s70
      %p82 = scmp.eq.s32.totalorder %s18, 3
      %p83 = por %p81, %p82
      %p85 = scmp.ne.s32.totalorder %s70, %s84
      %p86 = scmp.eq.s32.totalorder %s18, 0
      %p87 = por %p85, %p86
      %s88 = ssub.s32 %s12, %s19
      %p89 = scmp.eq.s32.totalorder %s88, 0
      %s91 = sadd.s32 %s90, 1
      %s92 = scalar_select %p89, %s90, %s91
      %p95 = pneg %p89
      %p96 = scmp.eq.s32.totalorder %s12, 3
      %p97 = por %p95, %p96
      %p98 = scmp.ne.s32.totalorder %s90, %s93
      %p99 = scmp.eq.s32.totalorder %s12, 0
      %p100 = por %p98, %p99
      %p101 = scmp.ne.s32.totalorder %s90, %s93
      %p102 = scmp.eq.s32.totalorder %s17, 3
      %p103 = por %p101, %p102
      %p104 = scmp.ne.s32.totalorder %s93, %s94
      %p105 = scmp.eq.s32.totalorder %s17, 0
      %p106 = por %p104, %p105
      %p107 = scmp.ne.s32.totalorder %s93, %s94
      %p108 = scmp.eq.s32.totalorder %s18, 3
      %p109 = por %p107, %p108
      %p111 = scmp.ne.s32.totalorder %s94, %s110
      %p112 = scmp.eq.s32.totalorder %s18, 0
      %p113 = por %p111, %p112
      %s115 = sadd.s32 %s114, 1
      %p118 = scmp.eq.s32.totalorder %s12, 3
      %p119 = scmp.ne.s32.totalorder %s114, %s116
      %p120 = scmp.eq.s32.totalorder %s12, 0
      %p121 = por %p119, %p120
      %p122 = scmp.ne.s32.totalorder %s114, %s116
      %p123 = scmp.eq.s32.totalorder %s17, 3
      %p124 = por %p122, %p123
      %p125 = scmp.ne.s32.totalorder %s116, %s117
      %p126 = scmp.eq.s32.totalorder %s17, 0
      %p127 = por %p125, %p126
      %p128 = scmp.ne.s32.totalorder %s116, %s117
      %p129 = scmp.eq.s32.totalorder %s18, 3
      %p130 = por %p128, %p129
      %p132 = scmp.ne.s32.totalorder %s117, %s131
      %p133 = scmp.eq.s32.totalorder %s18, 0
      %p134 = por %p132, %p133
      %s136 = sadd.s32 %s135, 1
      %p139 = scmp.eq.s32.totalorder %s12, 3
      %p140 = scmp.ne.s32.totalorder %s135, %s137
      %p141 = scmp.eq.s32.totalorder %s12, 0
      %p142 = por %p140, %p141
      %p143 = scmp.ne.s32.totalorder %s135, %s137
      %p144 = scmp.eq.s32.totalorder %s17, 3
      %p145 = por %p143, %p144
      %p146 = scmp.ne.s32.totalorder %s137, %s138
      %p147 = scmp.eq.s32.totalorder %s17, 0
      %p148 = por %p146, %p147
      %p149 = scmp.ne.s32.totalorder %s137, %s138
      %p150 = scmp.eq.s32.totalorder %s18, 3
      %p151 = por %p149, %p150
      %p153 = scmp.ne.s32.totalorder %s138, %s152
      %p154 = scmp.eq.s32.totalorder %s18, 0
      %p155 = por %p153, %p154
      %p156 = scmp.le.s32.totalorder 1, %s12
      %p157 = scmp.lt.s32.totalorder %s12, 5
      %p158 = pnand %p156, %p157
      %p159 = pneg %p158
      // Predicated region
      $region9: #{conv_block_forward.2} parent=5 // pred_check
        _
      $region10: #{conv_block_forward.2} parent=5 // pred_check_branch
        %161 = sbr.rel (%p158) target = $region12
      $region11: #{conv_block_forward.2} parent=5 // pred_region
        %s162 = ssub.s32 %s12, 1
        // Predicated region
        $region13: #{conv_block_forward.2} parent=11 // pred_check
          %p163 = pneg %p59
        $region14: #{conv_block_forward.2} parent=11 // pred_check_branch
          %165 = sbr.rel (%p163) target = $region16
        $region15: #{conv_block_forward.2} parent=11 // pred_region
          _
        $region16: #{conv_block_forward.2} parent=11 // pred_fallthru
          _
        // Predicated region
        $region17: #{conv_block_forward.2} parent=11 // pred_check
          %p166 = pneg %p80
        $region18: #{conv_block_forward.2} parent=11 // pred_check_branch
          %168 = sbr.rel (%p166) target = $region20
        $region19: #{conv_block_forward.2} parent=11 // pred_region
          _
        $region20: #{conv_block_forward.2} parent=11 // pred_fallthru
          _
      $region12: #{conv_block_forward.2} parent=5 // pred_fallthru
        _
      %p169 = scmp.lt.s32.totalorder %s12, 4
      // Predicated region
      $region21: #{conv_block_forward.2} parent=5 // pred_check
        %p170 = pneg %p169
      $region22: #{conv_block_forward.2} parent=5 // pred_check_branch
        %172 = sbr.rel (%p170) target = $region24
      $region23: #{conv_block_forward.2} parent=5 // pred_region
        // Predicated region
        $region25: #{conv_block_forward.2} parent=23 // pred_check
          %p173 = pneg %p32
        $region26: #{conv_block_forward.2} parent=23 // pred_check_branch
          %175 = sbr.rel (%p173) target = $region28
        $region27: #{conv_block_forward.2} parent=23 // pred_region
          %s176 = sand.u32 %s22, 1
          %s177 = sand.u32 %s22, 1
          %s178 = smul.addr %s177, 20
          %s179 = scalar_lea.vmem [#allocation2], %s178
          %s180 = smul.addr %s12, 4
          %s181 = scalar_lea.vmem %s0, %s180
          // Predicated region
          $region29: #{conv_block_forward.2} parent=27 // pred_check
            _
          $region30: #{conv_block_forward.2} parent=27 // pred_check_branch
            %183 = sbr.rel (0) target = $region32
          $region31: #{conv_block_forward.2} parent=27 // pred_region
            // Predicated region
            $region33: #{conv_block_forward.2} parent=31 // pred_check
              _
            $region34: #{conv_block_forward.2} parent=31 // pred_check_branch
              %185 = sbr.rel target = $region36
            $region35: #{conv_block_forward.2} parent=31 // pred_region
              // Predicated region
              $region48: #{conv_block_forward.2} parent=35 // pred_check
                _
              $region49: #{conv_block_forward.2} parent=35 // pred_check_branch
                %208 = sbr.rel (0) target = $region51
              $region50: #{conv_block_forward.2} parent=35 // pred_region
                loop: start=0, step=1, limit=1
                $region52: #{conv_block_forward.2} parent=50 // loop_pre_header
                  _
                $region53: #{conv_block_forward.2} parent=50 // loop_header
                  %s210 = sphi 0, %s214
                  %p211 = scmp.ge.s32.totalorder %s210, 1
                  %s215 = sphi %s181, %s181
                  %s216 = sphi %s179, %s179
                $region54: #{conv_block_forward.2} parent=50 // loop_header_branch
                  %213 = sbr.rel (%p211) target = $region58
                $region55: #{conv_block_forward.2} parent=50 // loop_body
                  _
                $region56: #{conv_block_forward.2} parent=50 // loop_footer
                  %s214 = sadd.s32 1, %s210
                $region57: #{conv_block_forward.2} parent=50 // loop_footer_branch
                  %209 = sbr.rel target = $region53
                $region58: #{conv_block_forward.2} parent=50 // loop_exit
                  _
                loop: start=0, step=1, limit=1
                $region59: #{conv_block_forward.2} parent=50 // loop_pre_header
                  _
                $region60: #{conv_block_forward.2} parent=50 // loop_header
                  %s219 = sphi 0, %s223
                  %p220 = scmp.ge.s32.totalorder %s219, 1
                  %s224 = sphi %s181, %s181
                  %s225 = sphi %s179, %s179
                $region61: #{conv_block_forward.2} parent=50 // loop_header_branch
                  %222 = sbr.rel (%p220) target = $region65
                $region62: #{conv_block_forward.2} parent=50 // loop_body
                  %v226 = vld [vmem:[%s224] sm:$0xf]
                  %227 = vst [vmem:[%s225] sm:$0xf] %v226
                  %v228 = vld [vmem:[%s224 + $0x10] sm:$0xf]
                  %229 = vst [vmem:[%s225 + $0x4] sm:$0xf] %v228
                  %v230 = vld [vmem:[%s224 + $0x20] sm:$0xf]
                  %231 = vst [vmem:[%s225 + $0x8] sm:$0xf] %v230
                  %v232 = vld [vmem:[%s224 + $0x30] sm:$0xf]
                  %233 = vst [vmem:[%s225 + $0xc] sm:$0xf] %v232
                  %v234 = vld [vmem:[%s224 + $0x40] sm:$0xf]
                  %235 = vst [vmem:[%s225 + $0x10] sm:$0xf] %v234
                $region63: #{conv_block_forward.2} parent=50 // loop_footer
                  %s223 = sadd.s32 1, %s219
                $region64: #{conv_block_forward.2} parent=50 // loop_footer_branch
                  %218 = sbr.rel target = $region60
                $region65: #{conv_block_forward.2} parent=50 // loop_exit
                  _
              $region51: #{conv_block_forward.2} parent=35 // pred_fallthru
                _
            $region36: #{conv_block_forward.2} parent=31 // pred_fallthru
              _
            // Predicated region
            $region37: #{conv_block_forward.2} parent=31 // pred_check
              _
            $region38: #{conv_block_forward.2} parent=31 // pred_check_branch
              %187 = sbr.rel (0) target = $region40
            $region39: #{conv_block_forward.2} parent=31 // pred_region
              loop: start=0, step=1, limit=1
              $region41: #{conv_block_forward.2} parent=39 // loop_pre_header
                _
              $region42: #{conv_block_forward.2} parent=39 // loop_header
                %s190 = sphi 0, %s194
                %p191 = scmp.ge.s32.totalorder %s190, 1
                %s195 = sphi %s181, %s181
                %s196 = sphi %s179, %s179
              $region43: #{conv_block_forward.2} parent=39 // loop_header_branch
                %193 = sbr.rel (%p191) target = $region47
              $region44: #{conv_block_forward.2} parent=39 // loop_body
                %v197 = vld [vmem:[%s195] sm:$0xf]
                %198 = vst [vmem:[%s196] sm:$0xf] %v197
                %v199 = vld [vmem:[%s195 + $0x10] sm:$0xf]
                %200 = vst [vmem:[%s196 + $0x4] sm:$0xf] %v199
                %v201 = vld [vmem:[%s195 + $0x20] sm:$0xf]
                %202 = vst [vmem:[%s196 + $0x8] sm:$0xf] %v201
                %v203 = vld [vmem:[%s195 + $0x30] sm:$0xf]
                %204 = vst [vmem:[%s196 + $0xc] sm:$0xf] %v203
                %v205 = vld [vmem:[%s195 + $0x40] sm:$0xf]
                %206 = vst [vmem:[%s196 + $0x10] sm:$0xf] %v205
              $region45: #{conv_block_forward.2} parent=39 // loop_footer
                %s194 = sadd.s32 1, %s190
              $region46: #{conv_block_forward.2} parent=39 // loop_footer_branch
                %189 = sbr.rel target = $region42
              $region47: #{conv_block_forward.2} parent=39 // loop_exit
                _
            $region40: #{conv_block_forward.2} parent=31 // pred_fallthru
              _
          $region32: #{conv_block_forward.2} parent=27 // pred_fallthru
            _
          %236 = vnop
        $region28: #{conv_block_forward.2} parent=23 // pred_fallthru
          _
      $region24: #{conv_block_forward.2} parent=5 // pred_fallthru
        _
      %p237 = scmp.le.s32.totalorder 1, %s12
      %p238 = scmp.lt.s32.totalorder %s12, 5
      %p239 = pnand %p237, %p238
      %p240 = pneg %p239
      // Predicated region
      $region66: #{conv_block_forward.2} parent=5 // pred_check
        _
      $region67: #{conv_block_forward.2} parent=5 // pred_check_branch
        %242 = sbr.rel (%p239) target = $region69
      $region68: #{conv_block_forward.2} parent=5 // pred_region
        %s243 = ssub.s32 %s12, 1
        %s244 = sand.u32 %s25, 1
        %s245 = sand.u32 %s25, 1
        %s246 = smul.addr %s245, 20
        %s247 = scalar_lea.vmem [#allocation2], %s246
        // Predicated region
        $region70: #{conv_block_forward.2} parent=68 // pred_check
          %p248 = pneg %p38
        $region71: #{conv_block_forward.2} parent=68 // pred_check_branch
          %250 = sbr.rel (%p248) target = $region73
        $region72: #{conv_block_forward.2} parent=68 // pred_region
          _
        $region73: #{conv_block_forward.2} parent=68 // pred_fallthru
          _
        %s251 = sand.u32 %s25, 1
        %s252 = sand.u32 %s25, 1
        %s253 = smul.addr %s252, 20
        %s254 = scalar_lea.vmem [#allocation2], %s253
        %p255 = pneg %p38
        %p256 = pneg %p35
        %p257 = pneg %p59
        %p258 = pneg %p56
        %p259 = pneg %p80
        %p260 = pneg %p77
        %p261 = pneg %p106
        %p262 = pneg %p103
        %p263 = scmp.lt.s32.totalorder %s17, 3
        %s264 = scalar_select %p263, %s17, 3
        %s265 = smul.addr %s264, 8
        %s266 = scalar_lea.vmem %s3, %s265
        %p267 = pneg %p127
        %p268 = pneg %p124
        %p269 = pneg %p148
        %p270 = pneg %p145
        %p271 = scmp.lt.s32.totalorder %s17, 3
        %s272 = scalar_select %p271, %s17, 3
        %s273 = smul.addr %s272, 8
        %s274 = scalar_lea.vmem %s3, %s273
        %p276 = scmp.eq.s32.totalorder %s17, 0
        // Predicated region
        $region74: #{conv_block_forward.2} parent=68 // pred_check
          %p277 = pneg %p276
        $region75: #{conv_block_forward.2} parent=68 // pred_check_branch
          %279 = sbr.rel (%p277) target = $region77
        $region76: #{conv_block_forward.2} parent=68 // pred_region
          %vm280 = vcmask 7168
          %281 = vst.msk [vmem:[%s4] sm:$0xff] %vm280, 0.0
          %282 = vst.msk [vmem:[%s5] sm:$0xff] %vm280, 0.0
        $region77: #{conv_block_forward.2} parent=68 // pred_fallthru
          _
        %v283 = vld [vmem:[%s1] sm:$0xf]
        %v284 = vld [vmem:[%s247] sm:$0xf]
        %v285 = vld [vmem:[%s247 + $0x4] sm:$0xf]
        %v286 = vld [vmem:[%s247 + $0x8] sm:$0xf]
        %v287 = vld [vmem:[%s247 + $0xc] sm:$0xf]
        %v288 = vld [vmem:[%s247 + $0x10] sm:$0x3]
        %v289 = vld [vmem:[%s2] sm:$0xff]
        %291 = vset.pattern.permute.xlu0 0
        %292 = vperm.xlu0 %291, %v289
        %v293 = vpop.permute.xlu0 %292
        %v300 = vunpack.c.l.b16 %v284
        %v301 = vunpack.c.l.b16 %v285
        %v302 = vunpack.c.l.b16 %v286
        %v303 = vunpack.c.l.b16 %v287
        %v304 = vunpack.c.l.b16 %v288
        %v305 = vpack.c.b16 %v301, %v300
        %v306 = vpack.c.b16 %v303, %v302
        %v307 = vpack.c.b16 %v304, %v304
        %vm310 = vcmask 293888
        %v312 = vsel %vm310, %v283, 0
        %vm314 = vcmask 1041408
        %v316 = vsel %vm314, %v307, 0
        %318 = vmatprep.subr.bf16.mxu0 0
        %319 = vmatpush1.bf16.msra.mxu0 %v305
        %320 = vmatprep.subr.bf16.mxu0 0
        %321 = vmatpush1.bf16.msra.mxu0 %v306
        %322 = vmatprep.subr.bf16.mxu0 0
        %323 = vmatpush1.bf16.msra.mxu0 %v316
        %324 = vmatprep.subr.bf16.mxu0 0
        %325 = vmatpush1.bf16.msra.mxu0 0
        %326 = vmatprep.subr.bf16.mxu0 0
        %327 = vmatpush1.bf16.msra.mxu0 0
        %328 = vmatprep.subr.bf16.mxu0 0
        %329 = vmatpush1.bf16.msra.mxu0 0
        %330 = vmatprep.subr.bf16.mxu0 0
        %331 = vmatpush1.bf16.msra.mxu0 0
        %332 = vmatprep.subr.bf16.mxu0 0
        %333 = vmatpush1.bf16.msra.mxu0 0
        %334 = vmatprep.subr.bf16.mxu0 0
        %335 = vmatpush1.bf16.msra.mxu0 0
        %336 = vmatprep.subr.bf16.mxu0 0
        %337 = vmatpush1.bf16.msra.mxu0 0
        %338 = vmatprep.subr.bf16.mxu0 0
        %339 = vmatpush1.bf16.msra.mxu0 0
        %340 = vmatprep.subr.bf16.mxu0 0
        %341 = vmatpush1.bf16.msra.mxu0 0
        %342 = vmatprep.subr.bf16.mxu0 0
        %343 = vmatpush1.bf16.msra.mxu0 0
        %344 = vmatprep.subr.bf16.mxu0 0
        %345 = vmatpush1.bf16.msra.mxu0 0
        %346 = vmatprep.subr.bf16.mxu0 0
        %347 = vmatpush1.bf16.msra.mxu0 0
        %348 = vmatprep.subr.bf16.mxu0 0
        %349 = vmatpush1.bf16.msra.mxu0 0
        %350 = vmatprep.mubr.bf16.mxu0 0
        %351 = vmatmul.mubr.bf16.gmra.mrb[0].mxu0 %v312
        %v352 = vpop.f32.mrb[0].mxu0
        %v353 = vadd.f32 %v293, %v352
        %v354 = vpop.f32.mrb[0].mxu0
        %v355 = vpop.f32.mrb[0].mxu0
        %v356 = vpop.f32.mrb[0].mxu0
        %357 = vdwg.mxu0
        %358 = vst [vmem:[%s274] sm:$0xff] %v353
        %s359 = smul.u32 %s17, 128
        %v360 = vlaneseq
        %v361 = vand.u32 %v360, 127
        %v362 = vstv %s359
        %v363 = vadd.s32 %v362, %v361
        %vm364 = vcmp.lt.s32.totalorder %v363, 392
        %v365 = vsel %vm364, %v353, 0.0
        %v366 = vld [vmem:[%s4] sm:$0xff]
        %367 = vadd.xlane.f32.xlu0 %v365
        %v368 = vpop.xlane.xlu0 %367
        %v369 = vadd.f32 %v366, %v368
        %vm370 = vcmask 7168
        %371 = vst.msk [vmem:[%s4] sm:$0xff] %vm370, %v369
        %v372 = vld [vmem:[%s5] sm:$0xff]
        %v373 = vmul.f32 %v365, %v365
        %374 = vadd.xlane.f32.xlu0 %v373
        %v375 = vpop.xlane.xlu0 %374
        %v376 = vadd.f32 %v372, %v375
        %377 = vst.msk [vmem:[%s5] sm:$0xff] %vm370, %v376
        %p378 = scmp.lt.s32.totalorder %s17, 3
        %s379 = scalar_select %p378, %s17, 3
        %s380 = smul.addr %s379, 8
        %s381 = scalar_lea.vmem %s3, %s380
        // Predicated region
        $region78: #{conv_block_forward.2} parent=68 // pred_check
          %p382 = pneg %p103
        $region79: #{conv_block_forward.2} parent=68 // pred_check_branch
          %384 = sbr.rel (%p382) target = $region81
        $region80: #{conv_block_forward.2} parent=68 // pred_region
          _
        $region81: #{conv_block_forward.2} parent=68 // pred_fallthru
          _
        // Predicated region
        $region82: #{conv_block_forward.2} parent=68 // pred_check
          %p385 = pneg %p124
        $region83: #{conv_block_forward.2} parent=68 // pred_check_branch
          %387 = sbr.rel (%p385) target = $region85
        $region84: #{conv_block_forward.2} parent=68 // pred_region
          _
        $region85: #{conv_block_forward.2} parent=68 // pred_fallthru
          _
        // Predicated region
        $region86: #{conv_block_forward.2} parent=68 // pred_check
          %p388 = pneg %p145
        $region87: #{conv_block_forward.2} parent=68 // pred_check_branch
          %390 = sbr.rel (%p388) target = $region89
        $region88: #{conv_block_forward.2} parent=68 // pred_region
          _
        $region89: #{conv_block_forward.2} parent=68 // pred_fallthru
          _
        // Predicated region
        $region90: #{conv_block_forward.2} parent=68 // pred_check
          %p391 = pneg %p124
        $region91: #{conv_block_forward.2} parent=68 // pred_check_branch
          %393 = sbr.rel (%p391) target = $region93
        $region92: #{conv_block_forward.2} parent=68 // pred_region
          _
        $region93: #{conv_block_forward.2} parent=68 // pred_fallthru
          _
        // Predicated region
        $region94: #{conv_block_forward.2} parent=68 // pred_check
          %p394 = pneg %p145
        $region95: #{conv_block_forward.2} parent=68 // pred_check_branch
          %396 = sbr.rel (%p394) target = $region97
        $region96: #{conv_block_forward.2} parent=68 // pred_region
          _
        $region97: #{conv_block_forward.2} parent=68 // pred_fallthru
          _
      $region69: #{conv_block_forward.2} parent=5 // pred_fallthru
        _
      %p397 = scmp.le.s32.totalorder 2, %s12
      // Predicated region
      $region98: #{conv_block_forward.2} parent=5 // pred_check
        %p398 = pneg %p397
      $region99: #{conv_block_forward.2} parent=5 // pred_check_branch
        %400 = sbr.rel (%p398) target = $region101
      $region100: #{conv_block_forward.2} parent=5 // pred_region
        %s401 = ssub.s32 %s12, 2
        // Predicated region
        $region102: #{conv_block_forward.2} parent=100 // pred_check
          %p402 = pneg %p109
        $region103: #{conv_block_forward.2} parent=100 // pred_check_branch
          %404 = sbr.rel (%p402) target = $region105
        $region104: #{conv_block_forward.2} parent=100 // pred_region
          %p405 = scmp.lt.s32.totalorder %s18, 3
          %s406 = scalar_select %p405, %s18, 3
          %s407 = smul.addr %s406, 8
          %s408 = scalar_lea.vmem %s3, %s407
        $region105: #{conv_block_forward.2} parent=100 // pred_fallthru
          _
      $region101: #{conv_block_forward.2} parent=5 // pred_fallthru
        _
    $region6: #{conv_block_forward.2} parent=1 // loop_footer
      %s16 = sadd.s32 1, %s12
    $region7: #{conv_block_forward.2} parent=1 // loop_footer_branch
      %11 = sbr.rel target = $region3
    $region8: #{conv_block_forward.2} parent=1 // loop_exit
      _

</llo_original>
